<compile_context>
chip_gen: v5e
topology: v5e:2x2
jax: 0.10.0
libtpu: 0.0.40
codegen_flags: <defaults>
</compile_context>

<pallas_src>
import functools

import jax
import jax.numpy as jnp
from jax.experimental import pallas as pl
from jax.experimental.pallas import tpu as pltpu

_LANE = 128
_SMALL_K_MAX = 8              # direct-accumulation path threshold
_VMEM_BUDGET = 20 << 20       # resident footprint target (fits all generations)
_DMA_BLOCK_TARGET = 4 << 20   # ~4 MiB input blocks amortize the ~0.35us/step cost


def _round_up(x, m):
    return (x + m - 1) // m * m


def _plan_pieces(kernel_size, pad):
    """Decompose the length-k window into power-of-two sub-windows.

    Returns (center_x, staged_w1, pieces):
      center_x : odd kernel whose single width-1 term sits at the window centre
                 (offset == pad) and can be read straight from the x block.
      staged_w1: an off-centre width-1 piece exists, so the replicate-padded
                 width-1 row must be staged in VMEM first.
      pieces   : tuple of (width, offset); width >= 2 pieces are read from the
                 doubling scratch, width == 1 pieces from the staged row.
    """
    def runs_to_pieces(runs):
        out = []
        for s, n in runs:
            o, i = s, 0
            while (1 << i) <= n:
                if (n >> i) & 1:
                    out.append((1 << i, o))
                    o += 1 << i
                i += 1
        return out

    k = kernel_size
    if k % 2 == 1:
        if pad % 2 == 0:
            # Split around the centre element: both runs are even-length, so
            # the only width-1 term is the centre one (never touches padding).
            return True, False, tuple(runs_to_pieces([(0, pad), (pad + 1, pad)]))
        # pad odd -> an off-centre width-1 piece is unavoidable.
        return False, True, tuple(runs_to_pieces([(0, k)]))
    half = k // 2
    if half % 2 == 0:
        return False, False, tuple(runs_to_pieces([(0, half), (half, half)]))
    return False, False, tuple(runs_to_pieces([(0, k)]))


def _store_output(o_ref, xp_ref, acc, *, kernel_size, stride, C, l_dense, l_out):
    out = acc * (1.0 / kernel_size)
    if stride == 1:
        o_ref[...] = out.astype(o_ref.dtype)
    else:
        # stride > 1 folded in-kernel: stage the dense result once in VMEM and
        # emit only every stride-th window (cuts output HBM traffic ~stride x
        # and avoids a separate XLA slice kernel).
        xp_ref[:, pl.ds(0, l_dense * C)] = out
        for t in range(l_out):
            o_ref[:, pl.ds(t * C, C)] = (
                xp_ref[:, pl.ds(t * stride * C, C)].astype(o_ref.dtype))


def _moving_avg_small_kernel(x_ref, o_ref, xp_ref, *, kernel_size, stride, pad,
                             L, C, l_dense, l_out, center_off):
    """kernel_size <= 8: stage the padded row once, then direct accumulation."""
    LC = L * C
    start0 = center_off - pad * C
    # Stage the raw rows once as f32 at a 128-aligned lane offset (one store).
    xp_ref[:, pl.ds(center_off, LC)] = x_ref[...].astype(jnp.float32)
    if pad > 0:
        first = x_ref[:, pl.ds(0, C)].astype(jnp.float32)
        last = x_ref[:, pl.ds(LC - C, C)].astype(jnp.float32)
        for m in range(pad):
            xp_ref[:, pl.ds(start0 + m * C, C)] = first
            xp_ref[:, pl.ds(center_off + LC + m * C, C)] = last
    # k shifted loads accumulated in vregs: no intermediate stores, which keeps
    # the single vector-store port free on v5e.
    acc = xp_ref[:, pl.ds(start0, l_dense * C)]
    for j in range(1, kernel_size):
        acc = acc + xp_ref[:, pl.ds(start0 + j * C, l_dense * C)]
    _store_output(o_ref, xp_ref, acc, kernel_size=kernel_size, stride=stride,
                  C=C, l_dense=l_dense, l_out=l_out)


def _moving_avg_doubling_kernel(x_ref, o_ref, xp_ref, *, kernel_size, stride,
                                pad, L, C, l_pad, l_dense, l_out, region_lanes,
                                center_x, staged_w1, pieces):
    """kernel_size > 8: O(log k) binary-doubling window sums, ping-pong scratch."""
    LC = L * C
    f32 = jnp.float32
    first = x_ref[:, pl.ds(0, C)].astype(f32)
    last = x_ref[:, pl.ds(LC - C, C)].astype(f32)

    by_width = {}
    for w_, o_ in pieces:
        by_width.setdefault(w_, []).append(o_)
    max_w = max(by_width)
    assert staged_w1 or 1 not in by_width

    acc = None
    if center_x:
        # Odd kernel, even pad: the single width-1 term is the window centre,
        # which is always a real x element -> just the (cast) x block itself.
        acc = x_ref[...].astype(f32)

    cur = 0
    if staged_w1:
        # Odd kernel with odd pad: stage the replicate-padded width-1 row once
        # and start the doubling tree from width 1.
        xp_ref[:, pl.ds(pad * C, LC)] = x_ref[...].astype(f32)
        for m in range(pad):
            xp_ref[:, pl.ds(m * C, C)] = first
            xp_ref[:, pl.ds((pad + L + m) * C, C)] = last
        for o in by_width.get(1, ()):
            piece = xp_ref[:, pl.ds(o * C, l_dense * C)]
            acc = piece if acc is None else acc + piece
        w = 1
    else:
        # Fused first pass: width-2 window sums are built straight from the
        # x block (cast on the fly) -- no staged f32 copy of the raw row.
        if L >= 2:
            xp_ref[:, pl.ds(pad * C, (L - 1) * C)] = (
                x_ref[:, pl.ds(0, (L - 1) * C)].astype(f32)
                + x_ref[:, pl.ds(C, (L - 1) * C)].astype(f32))
        first2 = first + first
        last2 = last + last
        # TODO(synk): collapse the 2*pad narrow edge stores into 2 wide stores
        # (needs sub-128-lane tile assembly); they are a small fraction of the
        # per-step store traffic.
        for m in range(pad):
            xp_ref[:, pl.ds(m * C, C)] = first2
            xp_ref[:, pl.ds((pad + L - 1 + m) * C, C)] = last2
        for o in by_width.get(2, ()):
            piece = xp_ref[:, pl.ds(o * C, l_dense * C)]
            acc = piece if acc is None else acc + piece
        w = 2

    # Doubling tree, ping-ponging between two disjoint scratch regions so no
    # pass reads and writes overlapping lanes of the same buffer.
    while w < max_w:
        n_dst = l_pad - 2 * w + 1
        nxt = 1 - cur
        xp_ref[:, pl.ds(nxt * region_lanes, n_dst * C)] = (
            xp_ref[:, pl.ds(cur * region_lanes, n_dst * C)]
            + xp_ref[:, pl.ds(cur * region_lanes + w * C, n_dst * C)])
        cur = nxt
        w *= 2
        for o in by_width.get(w, ()):
            piece = xp_ref[:, pl.ds(cur * region_lanes + o * C, l_dense * C)]
            acc = piece if acc is None else acc + piece

    _store_output(o_ref, xp_ref, acc, kernel_size=kernel_size, stride=stride,
                  C=C, l_dense=l_dense, l_out=l_out)


def moving_avg(x, kernel_size, stride=1):
    """Equivalent of the PyTorch moving_avg module. x: (B, L, C) -> (B, L_out, C)."""
    if kernel_size < 1:
        raise ValueError("kernel_size must be >= 1")
    if stride < 1:
        raise ValueError("stride must be >= 1")
    B, L, C = x.shape
    pad = (kernel_size - 1) // 2
    l_pad = L + 2 * pad
    l_dense = l_pad - kernel_size + 1
    if l_dense < 1:
        raise ValueError("kernel_size too large for sequence length")
    l_out = (l_pad - kernel_size) // stride + 1
    LC = L * C
    out_lanes = l_out * C

    small = kernel_size <= _SMALL_K_MAX
    if small:
        center_off = _round_up(pad * C, _LANE)
        scratch_lanes = _round_up(max(center_off + LC + pad * C, l_dense * C), _LANE)
        kernel = functools.partial(
            _moving_avg_small_kernel, kernel_size=kernel_size, stride=stride,
            pad=pad, L=L, C=C, l_dense=l_dense, l_out=l_out, center_off=center_off)
    else:
        center_x, staged_w1, pieces = _plan_pieces(kernel_size, pad)
        region_lanes = _round_up(l_pad * C, _LANE)
        scratch_lanes = 2 * region_lanes
        kernel = functools.partial(
            _moving_avg_doubling_kernel, kernel_size=kernel_size, stride=stride,
            pad=pad, L=L, C=C, l_pad=l_pad, l_dense=l_dense, l_out=l_out,
            region_lanes=region_lanes, center_x=center_x, staged_w1=staged_w1,
            pieces=pieces)

    # ---- row (batch) blocking ------------------------------------------------
    itemsize = jnp.dtype(x.dtype).itemsize
    in_row = LC * itemsize
    out_row = out_lanes * itemsize
    # Double-buffered in/out blocks + the single-buffered f32 scratch.
    per_row_vmem = 2 * in_row + 2 * out_row + scratch_lanes * 4

    if B <= 8:
        # Cannot tile the batch below the 8-sublane granularity.
        # TODO(synk): fold time chunks (with a pad-sized halo) into the row dim
        # to recover sublane occupancy / v7x core parallelism at tiny batch.
        tb = B
    else:
        cap_vmem = max(1, _VMEM_BUDGET // per_row_vmem)
        cap_dma = max(1, _DMA_BLOCK_TARGET // max(in_row, 1))
        # >= ~4 grid steps so BlockSpec double-buffering overlaps DMA with
        # compute and the parallel axis can shard across both v7x TensorCores.
        cap_pipe = _round_up(pl.cdiv(B, 4), 8)
        tb = min(cap_vmem, cap_dma, cap_pipe, B)
        tb = max(8, (tb // 8) * 8)
        if tb >= B:
            tb = B
    grid = (pl.cdiv(B, tb),)

    footprint = tb * per_row_vmem
    vmem_limit = int(min(max(footprint + (2 << 20), 16 << 20), 48 << 20))

    # Free reshape: lane-dense rows even when C < 128.
    x2 = x.reshape(B, LC)

    out2 = pl.pallas_call(
        kernel,
        out_shape=jax.ShapeDtypeStruct((B, out_lanes), x.dtype),
        grid_spec=pltpu.PrefetchScalarGridSpec(
            num_scalar_prefetch=0,
            grid=grid,
            in_specs=[pl.BlockSpec((tb, LC), lambda r: (r, 0))],
            out_specs=pl.BlockSpec((tb, out_lanes), lambda r: (r, 0)),
            scratch_shapes=[pltpu.VMEM((tb, scratch_lanes), jnp.float32)],
        ),
        compiler_params=pltpu.CompilerParams(
            dimension_semantics=("parallel",),
            vmem_limit_bytes=vmem_limit,
        ),
    )(x2)

    return out2.reshape(B, l_out, C)


def _reference(x, kernel_size, stride):
    """Pure-JAX mirror of the PyTorch forward."""
    pad = (kernel_size - 1) // 2
    xpad = jnp.concatenate(
        [jnp.repeat(x[:, :1, :], pad, axis=1), x,
         jnp.repeat(x[:, -1:, :], pad, axis=1)], axis=1)
    l_out = (xpad.shape[1] - kernel_size) // stride + 1
    return jnp.stack(
        [xpad[:, t * stride:t * stride + kernel_size, :].mean(axis=1)
         for t in range(l_out)], axis=1)


if __name__ == "__main__":
    key = jax.random.PRNGKey(0)
    # (B, L, C, kernel_size, stride): covers small-k, fused centre-split large-k
    # (DLinear default k=25), fused even-k, staged odd-pad large-k, stride>1
    # folding, and a multi-step grid with a partial last block (B % tb != 0).
    cases = [
        (2, 16, 8, 5, 1),
        (2, 16, 8, 4, 2),
        (2, 16, 8, 25, 1),
        (2, 16, 8, 24, 2),
        (2, 16, 8, 11, 1),
        (20, 32, 8, 25, 1),
    ]
    for i, (B, L, C, k, s) in enumerate(cases):
        xk = jax.random.fold_in(key, i)
        x = jax.random.normal(xk, (B, L, C), dtype=jnp.float32)
        out = jax.block_until_ready(moving_avg(x, k, s))
        ref = _reference(x, k, s)
        assert out.shape == ref.shape, (B, L, C, k, s, out.shape, ref.shape)
        assert jnp.allclose(out, ref, atol=1e-5, rtol=1e-5), (B, L, C, k, s)
    print("KERNEL_OK")
</pallas_src>

<mosaic_0001>
module attributes {stable_mosaic.version = 11 : i64} {
  func.func @_moving_avg_small_kernel(%arg0: i32, %arg1: memref<2x128xf32, #tpu.memory_space<vmem>>, %arg2: memref<2x128xf32, #tpu.memory_space<vmem>>, %arg3: memref<2x384xf32, #tpu.memory_space<vmem>>) attributes {dimension_semantics = [#tpu.dimension_semantics<parallel>], iteration_bounds = array<i64: 1>, scalar_prefetch = 0 : i64, scratch_operands = 1 : i64, tpu.core_type = #tpu.core_type<tc>, window_params = [{transform_indices = @transform_0, window_bounds = array<i64: 2, 128>}, {transform_indices = @transform_1, window_bounds = array<i64: 2, 128>}]} {
    %c0 = arith.constant 0 : index
    %c0_0 = arith.constant 0 : index
    %0 = vector.load %arg1[%c0, %c0_0] : memref<2x128xf32, #tpu.memory_space<vmem>>, vector<2x128xf32>
    %c0_1 = arith.constant 0 : index
    %c128 = arith.constant 128 : index
    %1 = vector.load %arg3[%c0_1, %c128] : memref<2x384xf32, #tpu.memory_space<vmem>>, vector<2x128xf32>
    tpu.vector_store %arg3[%c0_1, %c128], %0 {strides = array<i32>} : memref<2x384xf32, #tpu.memory_space<vmem>>, vector<2x128xf32>,
    %c0_2 = arith.constant 0 : index
    %c0_3 = arith.constant 0 : index
    %2 = vector.load %arg1[%c0_2, %c0_3] : memref<2x128xf32, #tpu.memory_space<vmem>>, vector<2x8xf32>
    %c0_4 = arith.constant 0 : index
    %c120 = arith.constant 120 : index
    %3 = vector.load %arg1[%c0_4, %c120] : memref<2x128xf32, #tpu.memory_space<vmem>>, vector<2x8xf32>
    %c0_5 = arith.constant 0 : index
    %c112 = arith.constant 112 : index
    %4 = vector.load %arg3[%c0_5, %c112] : memref<2x384xf32, #tpu.memory_space<vmem>>, vector<2x8xf32>
    tpu.vector_store %arg3[%c0_5, %c112], %2 {strides = array<i32>} : memref<2x384xf32, #tpu.memory_space<vmem>>, vector<2x8xf32>,
    %c0_6 = arith.constant 0 : index
    %c256 = arith.constant 256 : index
    %5 = vector.load %arg3[%c0_6, %c256] : memref<2x384xf32, #tpu.memory_space<vmem>>, vector<2x8xf32>
    tpu.vector_store %arg3[%c0_6, %c256], %3 {strides = array<i32>} : memref<2x384xf32, #tpu.memory_space<vmem>>, vector<2x8xf32>,
    %c0_7 = arith.constant 0 : index
    %c120_8 = arith.constant 120 : index
    %6 = vector.load %arg3[%c0_7, %c120_8] : memref<2x384xf32, #tpu.memory_space<vmem>>, vector<2x8xf32>
    tpu.vector_store %arg3[%c0_7, %c120_8], %2 {strides = array<i32>} : memref<2x384xf32, #tpu.memory_space<vmem>>, vector<2x8xf32>,
    %c0_9 = arith.constant 0 : index
    %c264 = arith.constant 264 : index
    %7 = vector.load %arg3[%c0_9, %c264] : memref<2x384xf32, #tpu.memory_space<vmem>>, vector<2x8xf32>
    tpu.vector_store %arg3[%c0_9, %c264], %3 {strides = array<i32>} : memref<2x384xf32, #tpu.memory_space<vmem>>, vector<2x8xf32>,
    %c0_10 = arith.constant 0 : index
    %c112_11 = arith.constant 112 : index
    %8 = vector.load %arg3[%c0_10, %c112_11] : memref<2x384xf32, #tpu.memory_space<vmem>>, vector<2x128xf32>
    %c0_12 = arith.constant 0 : index
    %c120_13 = arith.constant 120 : index
    %9 = vector.load %arg3[%c0_12, %c120_13] : memref<2x384xf32, #tpu.memory_space<vmem>>, vector<2x128xf32>
    %10 = arith.addf %8, %9 : vector<2x128xf32>
    %c0_14 = arith.constant 0 : index
    %c128_15 = arith.constant 128 : index
    %11 = vector.load %arg3[%c0_14, %c128_15] : memref<2x384xf32, #tpu.memory_space<vmem>>, vector<2x128xf32>
    %12 = arith.addf %10, %11 : vector<2x128xf32>
    %c0_16 = arith.constant 0 : index
    %c136 = arith.constant 136 : index
    %13 = vector.load %arg3[%c0_16, %c136] : memref<2x384xf32, #tpu.memory_space<vmem>>, vector<2x128xf32>
    %14 = arith.addf %12, %13 : vector<2x128xf32>
    %c0_17 = arith.constant 0 : index
    %c144 = arith.constant 144 : index
    %15 = vector.load %arg3[%c0_17, %c144] : memref<2x384xf32, #tpu.memory_space<vmem>>, vector<2x128xf32>
    %16 = arith.addf %14, %15 : vector<2x128xf32>
    %cst = arith.constant 2.000000e-01 : f32
    %17 = vector.broadcast %cst : f32 to vector<2x128xf32>
    %18 = arith.mulf %16, %17 : vector<2x128xf32>
    %c0_18 = arith.constant 0 : index
    %c0_19 = arith.constant 0 : index
    %19 = vector.load %arg2[%c0_18, %c0_19] : memref<2x128xf32, #tpu.memory_space<vmem>>, vector<2x128xf32>
    tpu.vector_store %arg2[%c0_18, %c0_19], %18 {strides = array<i32>} : memref<2x128xf32, #tpu.memory_space<vmem>>, vector<2x128xf32>,
    return
  }
  func.func @transform_0(%arg0: i32) -> (i32, i32) {
    %c0_i32 = arith.constant 0 : i32
    %c0_i32_0 = arith.constant 0 : i32
    return %arg0, %c0_i32 : i32, i32
  }
  func.func @transform_1(%arg0: i32) -> (i32, i32) {
    %c0_i32 = arith.constant 0 : i32
    %c0_i32_0 = arith.constant 0 : i32
    return %arg0, %c0_i32 : i32, i32
  }
}

</mosaic_0001>

<llo_original>
// kernel: tpu_custom_call.1
$region0: #{tpu_custom_call.1}
  #allocation0 [shape = 'u32[]', space=smem, size = 0x4, offset = 0x4, fixed_abs, tag = 'smem constant byte address 0x4 - core index']
  #allocation1 [shape = 'u32[72,128]{1,0:T(1,128)}', space=vmem, size = 0x9000, scoped, tag = 'internal scratch']
  #allocation2 [shape = 'f32[2,384]{1,0:T(2,128)}', space=vmem, size = 0xc00, scoped, tag = 'scratch operand']
  %s0 = inlined_call_operand.hbm [shape: f32[2,128], index: 0, kind: input, shape index: {}]
  %s1 = inlined_call_operand.hbm [shape: f32[2,128], index: 1, kind: output, shape index: {}]
  %s2 = sld [smem:[#allocation0]]
  $region18: #{tpu_custom_call.1} parent=0
    _
  %s4 = ssub.s32 1, %s2
  %s5 = scalar_select 0, %s4, %s2
  $region1: #{tpu_custom_call.1} parent=0
    #allocation3 [shape = 'u8[1024]{0}', space=vmem, size = 0x400, scoped, tag = 'input window, operand 0, single buffered']
    #allocation4 [shape = 's32[1]{0}', space=sflag, size = 0x4, scoped, tag = 'scoped memory for tpu_custom_call.1']
    #allocation5 [shape = 's32[1]{0}', space=sflag, size = 0x4, scoped, tag = 'scoped memory for tpu_custom_call.1']
    #allocation6 [shape = 'u8[1024]{0}', space=vmem, size = 0x400, scoped, tag = 'output window, operand 0, single buffered']
    %6 = vsyncpa [#allocation4], 0
    %7 = vsyncpa [#allocation5], 0
    // Predicated region
    $region2: #{tpu_custom_call.1} parent=1 // pred_check
      _
    $region3: #{tpu_custom_call.1} parent=1 // pred_check_branch
      %9 = sbr.rel (0) target = $region5
    $region4: #{tpu_custom_call.1} parent=1 // pred_region
      %11 = vsyncadd [#allocation4], 0
      %s13 = sshll.u32 %s0, 4
      %s14 = int_to_ptr.hbm [resolvable:$true] %s13
      %s15 = sshll.u32 [#allocation3], 4
      %s16 = int_to_ptr.vmem [resolvable:$true] %s15
      %18 = dma.hbm_to_vmem [thread:$0]  %s14, 32, %s16, [#allocation4]
    $region5: #{tpu_custom_call.1} parent=1 // pred_fallthru
      _
    // Predicated region
    $region6: #{tpu_custom_call.1} parent=1 // pred_check
      _
    $region7: #{tpu_custom_call.1} parent=1 // pred_check_branch
      %20 = sbr.rel (0) target = $region9
    $region8: #{tpu_custom_call.1} parent=1 // pred_region
      %22 = dma.done [#allocation4], 32
    $region9: #{tpu_custom_call.1} parent=1 // pred_fallthru
      _
    %v23 = vld [vmem:[#allocation3] sm:$0x3]
    %24 = vst [vmem:[#allocation2 + $0x2] sm:$0x3] %v23
    %v25 = vld [vmem:[#allocation3] sm:$0x3]
    %27 = vrot.lane.b32.xlu0 %v25, 112
    %v28 = vpop.permute.xlu0 %27
    %vm30 = vcmask 976768
    %31 = vst.msk [vmem:[#allocation2] sm:$0x3] %vm30, %v28
    %32 = vrot.lane.b32.xlu0 %v25, 8
    %v33 = vpop.permute.xlu0 %32
    %vm35 = vcmask 58368
    %36 = vst.msk [vmem:[#allocation2 + $0x4] sm:$0x3] %vm35, %v33
    %37 = vrot.lane.b32.xlu0 %v25, 120
    %v38 = vpop.permute.xlu0 %37
    %vm40 = vcmask 1042368
    %41 = vst.msk [vmem:[#allocation2] sm:$0x3] %vm40, %v38
    %42 = vrot.lane.b32.xlu0 %v25, 16
    %v43 = vpop.permute.xlu0 %42
    %vm45 = vcmask 123968
    %46 = vst.msk [vmem:[#allocation2 + $0x4] sm:$0x3] %vm45, %v43
    %v47 = vld [vmem:[#allocation2] sm:$0xf]
    %49 = vrot.lane.b32.xlu0 %v47, 120
    %v50 = vpop.permute.xlu0 %49
    %v51 = vrot.slane %v50, 2
    %vm52 = vcmask 982016
    %v53 = vsel %vm52, %v50, %v51
    %v55 = vadd.f32 %v47, %v53
    %v56 = vld [vmem:[#allocation2 + $0x2] sm:$0x3]
    %58 = vrot.lane.b32.xlu0 %v56, 112
    %v59 = vpop.permute.xlu0 %58
    %v60 = vrot.slane %v59, 6
    %vm61 = vcmask 916480
    %v62 = vsel %vm61, %v60, %v59
    %v64 = vadd.f32 %v55, %v62
    %v65 = vld [vmem:[#allocation2 + $0x2] sm:$0xf]
    %67 = vrot.lane.b32.xlu0 %v65, 104
    %v68 = vpop.permute.xlu0 %67
    %v69 = vrot.slane %v68, 6
    %vm70 = vcmask 850944
    %v71 = vsel %vm70, %v69, %v68
    %v73 = vadd.f32 %v64, %v71
    %74 = vrot.lane.b32.xlu0 %v65, 96
    %v75 = vpop.permute.xlu0 %74
    %v76 = vrot.slane %v75, 6
    %vm77 = vcmask 785408
    %v78 = vsel %vm77, %v76, %v75
    %v80 = vadd.f32 %v73, %v78
    %v81 = vmul.f32 %v80, 0.2
    %83 = vst [vmem:[#allocation1] ss:$4 sm:$0xff] %v81
    %v84 = vld.sshfl [vmem:[#allocation1] sm:$0xff pattern:$0x73625140]
    %v85 = vld.sshfl [vmem:[#allocation1 + $0x8] sm:$0xff pattern:$0x73625140]
    %86 = vrot.lane.b32.xlu0 %v84, 16
    %v87 = vpop.permute.xlu0 %86
    %88 = vrot.lane.b32.xlu0 %v85, 16
    %v89 = vpop.permute.xlu0 %88
    %vm90 = vcmask 130048
    %v91 = vsel %vm90, %v87, %v89
    %93 = vst [vmem:[#allocation6] sm:$0x3] %v91
    // Predicated region
    $region10: #{tpu_custom_call.1} parent=1 // pred_check
      _
    $region11: #{tpu_custom_call.1} parent=1 // pred_check_branch
      %95 = sbr.rel (0) target = $region13
    $region12: #{tpu_custom_call.1} parent=1 // pred_region
      %97 = vsyncadd [#allocation5], 0
      %s99 = sshll.u32 [#allocation6], 4
      %s100 = int_to_ptr.vmem [resolvable:$true] %s99
      %s101 = sshll.u32 %s1, 4
      %s102 = int_to_ptr.hbm [resolvable:$true] %s101
      %104 = dma.vmem_to_hbm [thread:$0]  %s100, 32, %s102, [#allocation5]
    $region13: #{tpu_custom_call.1} parent=1 // pred_fallthru
      _
    // Predicated region
    $region14: #{tpu_custom_call.1} parent=1 // pred_check
      _
    $region15: #{tpu_custom_call.1} parent=1 // pred_check_branch
      %106 = sbr.rel (0) target = $region17
    $region16: #{tpu_custom_call.1} parent=1 // pred_region
      %108 = dma.done [#allocation5], 32
    $region17: #{tpu_custom_call.1} parent=1 // pred_fallthru
      _
    %109 = vsyncpa [#allocation4], 1
    %110 = vsyncpa [#allocation5], 1

</llo_original>
